<compile_context>
chip_gen: v7x
topology: tpu7x:2x2x1
jax: 0.10.0
libtpu: 0.0.40
codegen_flags: <defaults>
</compile_context>

<pallas_src>
import functools

import jax
import jax.numpy as jnp
from jax.experimental import pallas as pl
from jax.experimental.pallas import tpu as pltpu


def _round_up(v, m):
    return ((v + m - 1) // m) * m


def _vmem_capacity_bytes():
    """Generation-aware VMEM capacity (v5e/v6e: 128 MiB, v7x: 64 MiB per TC)."""
    try:
        cap = int(pltpu.get_tpu_info().vmem_capacity_bytes)
        if cap > 0:
            return cap
    except Exception:
        pass
    return 64 << 20  # conservative default (v7x per-TensorCore VMEM)


def _mclin_kernel(x_ref, w_ref, b_ref, o_ref, *, tb, lin, lout, groups, grouped):
    """One grid step: a tile of rows of ONE independent channel.

    x_ref: (tb, 1, trp, G*Lin)   lane-dense full last dim
    grouped=False: w_ref (G*Lin, G*Lout) block-diagonal, b_ref (1, G*Lout)
    grouped=True : w_ref (Lin, Lout)     per-group,      b_ref (1, Lout)
    o_ref: (tb, 1, trp, G*Lout)
    """
    trp = x_ref.shape[2]
    l_in = x_ref.shape[3]
    w = w_ref[...]
    b = b_ref[...]

    if tb == 1:
        x2 = x_ref[0, 0]                                   # (trp, G*Lin)
    else:
        # trp % 8 == 0 is guaranteed by the wrapper when tb > 1, so collapsing the
        # (tb, trp) sublane dims is a layout no-op -> one big MXU matmul, M = tb*trp.
        x2 = x_ref[...].reshape(tb * trp, l_in)

    def _store(col0, width, y2):
        yc = y2.astype(o_ref.dtype)
        if tb == 1:
            o_ref[0, 0, :, col0:col0 + width] = yc
        else:
            o_ref[:, :, :, col0:col0 + width] = yc.reshape(tb, 1, trp, width)

    if not grouped:
        # Single lane-dense matmul over the full (block-diagonal) weight.
        _store(0, groups * lout,
               jnp.dot(x2, w, preferred_element_type=jnp.float32) + b)
    else:
        # Lin/Lout are multiples of 128 -> every lane slice below is aligned.
        # Avoids the G x redundant MXU FLOPs / G^2 weight VMEM of block-diagonal.
        for g in range(groups):
            xg = x2[:, g * lin:(g + 1) * lin]
            _store(g * lout, lout,
                   jnp.dot(xg, w, preferred_element_type=jnp.float32) + b)


def _choose_tiles(batch, rp, in_row_bytes, out_row_bytes, w_block_bytes,
                  budget_bytes, block_bytes_target):
    """Pick (tb, trp): double-buffered activation blocks + resident weight fit the
    budget; tb*trp is sized by BYTES (amortizes ~0.35us/step pipeline overhead)."""
    per_row_db = 2 * (in_row_bytes + out_row_bytes)        # double-buffered x + y rows
    avail = max(budget_bytes - w_block_bytes, 8 * per_row_db)
    max_rows = max(8, avail // per_row_db)
    if rp <= max_rows:
        trp = rp                                           # full dim: always legal
    else:
        trp = max(8, (max_rows // 8) * 8)                  # partial tiles must be 8-aligned
    if trp % 8 != 0:
        # Full-but-unaligned RP: one (RP, L) matmul per step, no per-batch loop.
        tb = 1
    else:
        target_rows = max(trp, block_bytes_target // max(in_row_bytes + out_row_bytes, 1))
        rows = min(max_rows, target_rows)
        tb = max(1, min(batch, rows // trp))
    return int(tb), int(trp)


@functools.partial(
    jax.jit,
    static_argnames=("num_groups", "combined_flag", "compute_dtype", "out_dtype"))
def multichannel_linear_forward(x, weights, biases, *, num_groups, combined_flag=True,
                                compute_dtype=jnp.bfloat16, out_dtype=None):
    """Forward pass of the module.

    Args:
      x: combined_flag=True  -> (B, I*R, P, G*Lin)
         combined_flag=False -> (B, I, P, R, G*Lin)
      weights: (I, Lout, Lin)  -- torch.nn.Linear weight layout, one per channel
      biases:  (I, Lout) or None
      num_groups: G (number_of_shared_weight_groups)
      combined_flag: regular_channels_combined_with_independent_channels
      compute_dtype: activations/weights are cast to this at the call boundary
        (bf16 by default: halves HBM traffic, matches the bf16-native MXU);
        accumulation is always float32.  Pass jnp.float32 for module-exact math.
      out_dtype: output dtype (defaults to compute_dtype).
    """
    I, Lout, Lin = weights.shape
    G = int(num_groups)
    L = G * Lin            # input lane width per row
    N = G * Lout           # output lane width per row
    if out_dtype is None:
        out_dtype = compute_dtype

    if biases is None:
        biases = jnp.zeros((I, Lout), dtype=jnp.float32)

    if combined_flag:
        B, IR, P, Lx = x.shape
        assert IR % I == 0, "channel axis must equal independent * regular channels"
        assert Lx == L, "last dim must equal num_groups * input_length_per_group"
        R = IR // I
        RP = R * P
    else:
        B, I_, P, R, Lx = x.shape
        assert I_ == I and Lx == L
        RP = P * R
    x3 = x.reshape(B, I, RP, L).astype(compute_dtype)      # free reshape, no HBM transpose

    # Grouped path when each group's Lin/Lout is lane-aligned; otherwise lane-dense
    # block-diagonal weight so the whole row stays one matmul.
    grouped = (G > 1) and (Lin % 128 == 0) and (Lout % 128 == 0)

    w_t = jnp.swapaxes(weights, 1, 2)                      # (I, Lin, Lout)
    if grouped or G == 1:
        w_k = w_t.astype(compute_dtype)                    # (I, Lin, Lout)
        b_k = biases.reshape(I, 1, Lout).astype(jnp.float32)
        K_w, N_w = Lin, Lout
    else:
        eye = jnp.eye(G, dtype=w_t.dtype)
        w_k = jnp.einsum("gh,ikn->igkhn", eye, w_t).reshape(I, L, N).astype(compute_dtype)
        b_k = jnp.tile(biases, (1, G)).reshape(I, 1, N).astype(jnp.float32)
        K_w, N_w = L, N
    # TODO(synk): for per-channel weights too large for VMEM (Lin*Lout bf16 > ~16 MiB)
    # add a K/N grid axis instead of keeping the whole weight block resident.

    act_itemsize = jnp.dtype(compute_dtype).itemsize
    out_itemsize = jnp.dtype(out_dtype).itemsize
    in_row_bytes = _round_up(L, 128) * act_itemsize
    out_row_bytes = _round_up(N, 128) * out_itemsize
    # Weight + bias blocks are double-buffered by the grid pipeline.
    # TODO(synk): pipeline_mode=pl.Buffered(1) on the weight/bias specs would halve this
    # footprint (their block index only changes on the outermost channel axis).
    w_block_bytes = 2 * (_round_up(K_w, 16) * _round_up(N_w, 128) * act_itemsize
                         + _round_up(N_w, 128) * 4)

    cap = _vmem_capacity_bytes()                 # 64 MiB (v7x) / 128 MiB (v5e, v6e)
    tile_budget = (cap * 3) // 8                 # 24 MiB on v7x, 48 MiB on v5e/v6e
    limit_cap = (cap * 7) // 8                   # 56 MiB on v7x, 112 MiB on v5e/v6e

    tb, trp = _choose_tiles(B, RP, in_row_bytes, out_row_bytes, w_block_bytes,
                            budget_bytes=tile_budget, block_bytes_target=6 << 20)

    est_vmem = (2 * tb * _round_up(trp, 8) * (in_row_bytes + out_row_bytes)
                + w_block_bytes)
    vmem_limit = int(min(max(est_vmem + (16 << 20), 32 << 20), limit_cap))
    # Never clamp below the actual block footprint (+ headroom).
    vmem_limit = int(max(vmem_limit, min(est_vmem + (2 << 20), cap - (1 << 20))))

    # Channel axis outermost -> the weight/bias block indices are constant across all
    # inner steps, so Pallas keeps them resident instead of re-DMAing them.
    grid = (I, pl.cdiv(B, tb), pl.cdiv(RP, trp))

    kernel = functools.partial(_mclin_kernel, tb=tb, lin=Lin, lout=Lout,
                               groups=G, grouped=grouped)

    y3 = pl.pallas_call(
        kernel,
        out_shape=jax.ShapeDtypeStruct((B, I, RP, N), out_dtype),
        grid_spec=pltpu.PrefetchScalarGridSpec(
            num_scalar_prefetch=0,
            grid=grid,
            in_specs=[
                pl.BlockSpec((tb, 1, trp, L), lambda i, bt, m: (bt, i, m, 0)),
                pl.BlockSpec((None, K_w, N_w), lambda i, bt, m: (i, 0, 0)),
                pl.BlockSpec((None, 1, N_w), lambda i, bt, m: (i, 0, 0)),
            ],
            out_specs=pl.BlockSpec((tb, 1, trp, N), lambda i, bt, m: (bt, i, m, 0)),
        ),
        compiler_params=pltpu.CompilerParams(
            dimension_semantics=("parallel", "parallel", "parallel"),
            vmem_limit_bytes=vmem_limit,
        ),
    )(x3, w_k, b_k)

    if combined_flag:
        return y3.reshape(B, I * R, P, N)       # free reshape back to module layout
    return y3.reshape(B, I, P, R, N)


def _reference_forward(x, weights, biases, *, num_groups, combined_flag=True):
    """Pure-JAX reference mirroring the PyTorch forward (for verification)."""
    I, Lout, Lin = weights.shape
    G = num_groups
    if biases is None:
        biases = jnp.zeros((I, Lout), weights.dtype)
    if combined_flag:
        B, IR, P, _ = x.shape
        R = IR // I
        inter = x.reshape(B, I, R, P, G, Lin)
        y = jnp.einsum("birpgk,iok->birpgo", inter, weights) \
            + biases[None, :, None, None, None, :]
        return y.reshape(B, I * R, P, G * Lout)
    else:
        B, _, P, R, _ = x.shape
        inter = x.reshape(B, I, P, R, G, Lin)
        y = jnp.einsum("biprgk,iok->biprgo", inter, weights) \
            + biases[None, :, None, None, None, :]
        return y.reshape(B, I, P, R, G * Lout)


if __name__ == "__main__":
    key = jax.random.PRNGKey(0)

    # ---- Test 1: combined layout, small unaligned shapes (block-diagonal path, bf16) --
    I, P, R, G, Lin, Lout, B = 2, 3, 2, 2, 8, 16, 2
    k1, k2, k3, k4, k5 = jax.random.split(key, 5)
    weights = jax.random.normal(k1, (I, Lout, Lin), jnp.float32) * 0.1
    biases = jax.random.normal(k2, (I, Lout), jnp.float32) * 0.1
    x = jax.random.normal(k3, (B, I * R, P, G * Lin), jnp.float32)

    y = jax.block_until_ready(
        multichannel_linear_forward(x, weights, biases, num_groups=G, combined_flag=True))
    y_ref = _reference_forward(x, weights, biases, num_groups=G, combined_flag=True)
    assert y.shape == (B, I * R, P, G * Lout), y.shape
    assert jnp.allclose(y.astype(jnp.float32), y_ref, atol=5e-2, rtol=5e-2)

    # ---- Test 2: non-combined (5-D) layout --------------------------------------------
    x5 = jax.random.normal(k4, (B, I, P, R, G * Lin), jnp.float32)
    y5 = jax.block_until_ready(
        multichannel_linear_forward(x5, weights, biases, num_groups=G, combined_flag=False))
    y5_ref = _reference_forward(x5, weights, biases, num_groups=G, combined_flag=False)
    assert y5.shape == (B, I, P, R, G * Lout), y5.shape
    assert jnp.allclose(y5.astype(jnp.float32), y5_ref, atol=5e-2, rtol=5e-2)

    # ---- Test 3: lane-aligned per-group dims -> grouped kernel + flattened matmul -----
    I2, P2, R2, G2, Lin2, Lout2, B2 = 2, 8, 1, 2, 128, 128, 4
    kw2, kb2, kx2 = jax.random.split(k5, 3)
    weights2 = jax.random.normal(kw2, (I2, Lout2, Lin2), jnp.float32) * 0.05
    biases2 = jax.random.normal(kb2, (I2, Lout2), jnp.float32) * 0.05
    x2 = jax.random.normal(kx2, (B2, I2 * R2, P2, G2 * Lin2), jnp.float32)
    y2 = jax.block_until_ready(
        multichannel_linear_forward(x2, weights2, biases2, num_groups=G2, combined_flag=True))
    y2_ref = _reference_forward(x2, weights2, biases2, num_groups=G2, combined_flag=True)
    assert y2.shape == (B2, I2 * R2, P2, G2 * Lout2), y2.shape
    assert jnp.allclose(y2.astype(jnp.float32), y2_ref, atol=5e-2, rtol=5e-2)

    # ---- Test 4: float32 compute path (module-exact numerics) -------------------------
    y32 = jax.block_until_ready(
        multichannel_linear_forward(x, weights, biases, num_groups=G, combined_flag=True,
                                    compute_dtype=jnp.float32))
    assert y32.dtype == jnp.float32
    assert jnp.allclose(y32, y_ref, atol=1e-4, rtol=1e-4)

    print("KERNEL_OK")
</pallas_src>

<mosaic_0001>
module attributes {stable_mosaic.version = 11 : i64} {
  func.func @_mclin_kernel(%arg0: i32, %arg1: i32, %arg2: i32, %arg3: memref<1x1x6x16xbf16, #tpu.memory_space<vmem>>, %arg4: memref<1x16x32xbf16, #tpu.memory_space<vmem>>, %arg5: memref<1x1x32xf32, #tpu.memory_space<vmem>>, %arg6: memref<1x1x6x32xbf16, #tpu.memory_space<vmem>>) attributes {dimension_semantics = [#tpu.dimension_semantics<parallel>, #tpu.dimension_semantics<parallel>, #tpu.dimension_semantics<parallel>], iteration_bounds = array<i64: 2, 2, 1>, scalar_prefetch = 0 : i64, scratch_operands = 0 : i64, tpu.core_type = #tpu.core_type<tc>, window_params = [{transform_indices = @transform_0, window_bounds = array<i64: 1, 1, 6, 16>}, {transform_indices = @transform_1, window_bounds = array<i64: 1, 16, 32>}, {transform_indices = @transform_2, window_bounds = array<i64: 1, 1, 32>}, {transform_indices = @transform_3, window_bounds = array<i64: 1, 1, 6, 32>}]} {
    %c0 = arith.constant 0 : index
    %c0_0 = arith.constant 0 : index
    %c0_1 = arith.constant 0 : index
    %0 = vector.load %arg4[%c0, %c0_0, %c0_1] : memref<1x16x32xbf16, #tpu.memory_space<vmem>>, vector<1x16x32xbf16>
    %1 = vector.shape_cast %0 : vector<1x16x32xbf16> to vector<16x32xbf16>
    %c0_2 = arith.constant 0 : index
    %c0_3 = arith.constant 0 : index
    %c0_4 = arith.constant 0 : index
    %2 = vector.load %arg5[%c0_2, %c0_3, %c0_4] : memref<1x1x32xf32, #tpu.memory_space<vmem>>, vector<1x1x32xf32>
    %3 = vector.shape_cast %2 : vector<1x1x32xf32> to vector<1x32xf32>
    %c0_5 = arith.constant 0 : index
    %c0_6 = arith.constant 0 : index
    %c0_7 = arith.constant 0 : index
    %c0_8 = arith.constant 0 : index
    %4 = vector.load %arg3[%c0_5, %c0_6, %c0_7, %c0_8] : memref<1x1x6x16xbf16, #tpu.memory_space<vmem>>, vector<1x1x6x16xbf16>
    %5 = vector.shape_cast %4 : vector<1x1x6x16xbf16> to vector<6x16xbf16>
    %cst = arith.constant dense<0.000000e+00> : vector<6x32xf32>
    %6 = tpu.matmul %5, %1, %cst {dimension_numbers = #tpu.dot_dimension_numbers<[1], [0], [0], [1], [0, 0, 1, 1], [], []>} : vector<6x16xbf16>, vector<16x32xbf16>, vector<6x32xf32> -> vector<6x32xf32>
    %7 = vector.broadcast %3 : vector<1x32xf32> to vector<6x32xf32>
    %8 = arith.addf %6, %7 : vector<6x32xf32>
    %9 = arith.truncf %8 : vector<6x32xf32> to vector<6x32xbf16>
    %c0_9 = arith.constant 0 : index
    %c0_10 = arith.constant 0 : index
    %c0_11 = arith.constant 0 : index
    %c0_12 = arith.constant 0 : index
    %10 = vector.load %arg6[%c0_9, %c0_10, %c0_11, %c0_12] : memref<1x1x6x32xbf16, #tpu.memory_space<vmem>>, vector<1x1x6x32xbf16>
    %11 = vector.shape_cast %10 : vector<1x1x6x32xbf16> to vector<6x32xbf16>
    %12 = vector.shape_cast %9 : vector<6x32xbf16> to vector<1x1x6x32xbf16>
    tpu.vector_store %arg6[%c0_9, %c0_10, %c0_11, %c0_12], %12 {strides = array<i32>} : memref<1x1x6x32xbf16, #tpu.memory_space<vmem>>, vector<1x1x6x32xbf16>,
    return
  }
  func.func @transform_0(%arg0: i32, %arg1: i32, %arg2: i32) -> (i32, i32, i32, i32) {
    %c0_i32 = arith.constant 0 : i32
    %c0_i32_0 = arith.constant 0 : i32
    return %arg1, %arg0, %arg2, %c0_i32 : i32, i32, i32, i32
  }
  func.func @transform_1(%arg0: i32, %arg1: i32, %arg2: i32) -> (i32, i32, i32) {
    %c0_i32 = arith.constant 0 : i32
    %c0_i32_0 = arith.constant 0 : i32
    %c0_i32_1 = arith.constant 0 : i32
    return %arg0, %c0_i32, %c0_i32_0 : i32, i32, i32
  }
  func.func @transform_2(%arg0: i32, %arg1: i32, %arg2: i32) -> (i32, i32, i32) {
    %c0_i32 = arith.constant 0 : i32
    %c0_i32_0 = arith.constant 0 : i32
    %c0_i32_1 = arith.constant 0 : i32
    return %arg0, %c0_i32, %c0_i32_0 : i32, i32, i32
  }
  func.func @transform_3(%arg0: i32, %arg1: i32, %arg2: i32) -> (i32, i32, i32, i32) {
    %c0_i32 = arith.constant 0 : i32
    %c0_i32_0 = arith.constant 0 : i32
    return %arg1, %arg0, %arg2, %c0_i32 : i32, i32, i32, i32
  }
}

</mosaic_0001>

<llo_original>
// kernel: multichannel_linear_forward.1
$region0: #{multichannel_linear_forward.1}
  #allocation0 [shape = 'u32[]', space=smem, size = 0x4, offset = 0x4, fixed_abs, tag = 'smem constant byte address 0x4 - core index']
  #allocation1 [shape = 'u32[144,128]{1,0:T(1,128)}', space=vmem, size = 0x12000, scoped, tag = 'internal scratch']
  %s0 = inlined_call_operand.vmem [shape: bf16[2,2,6,16], index: 0, kind: input, shape index: {}]
  %s1 = inlined_call_operand.vmem [shape: bf16[2,16,32], index: 1, kind: input, shape index: {}]
  %s2 = inlined_call_operand.vmem [shape: f32[2,1,32], index: 2, kind: input, shape index: {}]
  %s3 = inlined_call_operand.vmem [shape: bf16[2,2,6,32], index: 3, kind: output, shape index: {}]
  %s4 = sld [smem:[#allocation0]]
  $region45: #{multichannel_linear_forward.1} parent=0
    _
  %s6 = ssub.s32 1, %s4
  %s7 = scalar_select 0, %s6, %s4
  loop: start=0, step=1, limit=6
  $region2: #{multichannel_linear_forward.1} parent=0 // loop_pre_header
    _
  $region3: #{multichannel_linear_forward.1} parent=0 // loop_header
    %s9 = sphi 0, %s13
    %p10 = scmp.ge.s32.totalorder %s9, 6
    %s16 = sphi 0, %s35
    %s17 = sphi 0, %s31
    %s18 = sphi 0, %s27
    %s19 = sphi 0, %s16
    %s20 = sphi 0, %s17
    %s21 = sphi 0, %s18
    %s22 = sphi 0, %s19
    %s23 = sphi 0, %s20
    %s24 = sphi 0, %s21
    %s42 = sphi 0, %s44
    %s45 = sphi 0, %s42
    %s46 = sphi 0, %s45
    %s62 = sphi 0, %s46
    %s68 = sphi 0, %s70
    %s71 = sphi 0, %s68
    %s72 = sphi 0, %s71
    %s88 = sphi 0, %s72
    %s94 = sphi 0, %s96
    %s97 = sphi 0, %s94
    %s98 = sphi 0, %s97
    %s114 = sphi 0, %s98
    %s124 = sphi 0, %s126
    %s127 = sphi 0, %s124
    %s128 = sphi 0, %s127
    %s144 = sphi 0, %s128
  $region4: #{multichannel_linear_forward.1} parent=0 // loop_header_branch
    %12 = sbr.rel (%p10) target = $region8
  $region5: #{multichannel_linear_forward.1} parent=0 // loop_body
    %s14 = ssub.s32 %s9, 1
    %s15 = ssub.s32 %s9, 2
    %s25 = sadd.s32 1, %s18
    %p26 = scmp.ge.s32.totalorder %s25, 1
    %s27 = scalar_select %p26, 0, %s25
    %s28 = sadd.s32 1, %s17
    %s29 = scalar_select %p26, %s28, %s17
    %p30 = scmp.ge.s32.totalorder %s29, 2
    %s31 = scalar_select %p30, 0, %s29
    %s32 = sadd.s32 1, %s16
    %s33 = scalar_select %p30, %s32, %s16
    %p34 = scmp.ge.s32.totalorder %s33, 2
    %s35 = scalar_select %p34, 0, %s33
    %s36 = ssub.s32 %s17, %s31
    %s37 = ssub.s32 %s16, %s35
    %s38 = sor.u32 %s36, %s37
    %s39 = ssub.s32 %s18, %s27
    %s40 = sor.u32 %s38, %s39
    %p41 = scmp.eq.s32.totalorder %s40, 0
    %s43 = sadd.s32 %s42, 1
    %s44 = scalar_select %p41, %s42, %s43
    %p47 = pneg %p41
    %p48 = scmp.eq.s32.totalorder %s9, 3
    %p49 = por %p47, %p48
    %p50 = scmp.ne.s32.totalorder %s42, %s45
    %p51 = scmp.eq.s32.totalorder %s9, 0
    %p52 = por %p50, %p51
    %p53 = scmp.ne.s32.totalorder %s42, %s45
    %p54 = scmp.eq.s32.totalorder %s14, 3
    %p55 = por %p53, %p54
    %p56 = scmp.ne.s32.totalorder %s45, %s46
    %p57 = scmp.eq.s32.totalorder %s14, 0
    %p58 = por %p56, %p57
    %p59 = scmp.ne.s32.totalorder %s45, %s46
    %p60 = scmp.eq.s32.totalorder %s15, 3
    %p61 = por %p59, %p60
    %p63 = scmp.ne.s32.totalorder %s46, %s62
    %p64 = scmp.eq.s32.totalorder %s15, 0
    %p65 = por %p63, %p64
    %s66 = ssub.s32 %s16, %s35
    %p67 = scmp.eq.s32.totalorder %s66, 0
    %s69 = sadd.s32 %s68, 1
    %s70 = scalar_select %p67, %s68, %s69
    %p73 = pneg %p67
    %p74 = scmp.eq.s32.totalorder %s9, 3
    %p75 = por %p73, %p74
    %p76 = scmp.ne.s32.totalorder %s68, %s71
    %p77 = scmp.eq.s32.totalorder %s9, 0
    %p78 = por %p76, %p77
    %p79 = scmp.ne.s32.totalorder %s68, %s71
    %p80 = scmp.eq.s32.totalorder %s14, 3
    %p81 = por %p79, %p80
    %p82 = scmp.ne.s32.totalorder %s71, %s72
    %p83 = scmp.eq.s32.totalorder %s14, 0
    %p84 = por %p82, %p83
    %p85 = scmp.ne.s32.totalorder %s71, %s72
    %p86 = scmp.eq.s32.totalorder %s15, 3
    %p87 = por %p85, %p86
    %p89 = scmp.ne.s32.totalorder %s72, %s88
    %p90 = scmp.eq.s32.totalorder %s15, 0
    %p91 = por %p89, %p90
    %s92 = ssub.s32 %s16, %s35
    %p93 = scmp.eq.s32.totalorder %s92, 0
    %s95 = sadd.s32 %s94, 1
    %s96 = scalar_select %p93, %s94, %s95
    %p99 = pneg %p93
    %p100 = scmp.eq.s32.totalorder %s9, 3
    %p101 = por %p99, %p100
    %p102 = scmp.ne.s32.totalorder %s94, %s97
    %p103 = scmp.eq.s32.totalorder %s9, 0
    %p104 = por %p102, %p103
    %p105 = scmp.ne.s32.totalorder %s94, %s97
    %p106 = scmp.eq.s32.totalorder %s14, 3
    %p107 = por %p105, %p106
    %p108 = scmp.ne.s32.totalorder %s97, %s98
    %p109 = scmp.eq.s32.totalorder %s14, 0
    %p110 = por %p108, %p109
    %p111 = scmp.ne.s32.totalorder %s97, %s98
    %p112 = scmp.eq.s32.totalorder %s15, 3
    %p113 = por %p111, %p112
    %p115 = scmp.ne.s32.totalorder %s98, %s114
    %p116 = scmp.eq.s32.totalorder %s15, 0
    %p117 = por %p115, %p116
    %s118 = ssub.s32 %s17, %s31
    %s119 = ssub.s32 %s16, %s35
    %s120 = sor.u32 %s118, %s119
    %s121 = ssub.s32 %s18, %s27
    %s122 = sor.u32 %s120, %s121
    %p123 = scmp.eq.s32.totalorder %s122, 0
    %s125 = sadd.s32 %s124, 1
    %s126 = scalar_select %p123, %s124, %s125
    %p129 = pneg %p123
    %p130 = scmp.eq.s32.totalorder %s9, 3
    %p131 = por %p129, %p130
    %p132 = scmp.ne.s32.totalorder %s124, %s127
    %p133 = scmp.eq.s32.totalorder %s9, 0
    %p134 = por %p132, %p133
    %p135 = scmp.ne.s32.totalorder %s124, %s127
    %p136 = scmp.eq.s32.totalorder %s14, 3
    %p137 = por %p135, %p136
    %p138 = scmp.ne.s32.totalorder %s127, %s128
    %p139 = scmp.eq.s32.totalorder %s14, 0
    %p140 = por %p138, %p139
    %p141 = scmp.ne.s32.totalorder %s127, %s128
    %p142 = scmp.eq.s32.totalorder %s15, 3
    %p143 = por %p141, %p142
    %p145 = scmp.ne.s32.totalorder %s128, %s144
    %p146 = scmp.eq.s32.totalorder %s15, 0
    %p147 = por %p145, %p146
    %p148 = scmp.le.s32.totalorder 1, %s9
    %p149 = scmp.lt.s32.totalorder %s9, 5
    %p150 = pnand %p148, %p149
    %p151 = pneg %p150
    // Predicated region
    $region9: #{multichannel_linear_forward.1} parent=5 // pred_check
      _
    $region10: #{multichannel_linear_forward.1} parent=5 // pred_check_branch
      %153 = sbr.rel (%p150) target = $region12
    $region11: #{multichannel_linear_forward.1} parent=5 // pred_region
      %s154 = ssub.s32 %s9, 1
    $region12: #{multichannel_linear_forward.1} parent=5 // pred_fallthru
      _
    %p155 = scmp.lt.s32.totalorder %s9, 4
    // Predicated region
    $region13: #{multichannel_linear_forward.1} parent=5 // pred_check
      %p156 = pneg %p155
    $region14: #{multichannel_linear_forward.1} parent=5 // pred_check_branch
      %158 = sbr.rel (%p156) target = $region16
    $region15: #{multichannel_linear_forward.1} parent=5 // pred_region
      // Predicated region
      $region17: #{multichannel_linear_forward.1} parent=15 // pred_check
        %p159 = pneg %p52
      $region18: #{multichannel_linear_forward.1} parent=15 // pred_check_branch
        %161 = sbr.rel (%p159) target = $region20
      $region19: #{multichannel_linear_forward.1} parent=15 // pred_region
        %p162 = scmp.lt.s32.totalorder %s17, 1
        %s163 = scalar_select %p162, %s17, 1
        %p164 = scmp.lt.s32.totalorder %s16, 1
        %s165 = scalar_select %p164, %s16, 1
        %p166 = scmp.lt.s32.totalorder %s18, 0
        %s167 = scalar_select %p166, %s18, 0
        %s168 = sadd.s32 %s167, %s165
        %s169 = smul.addr %s163, 2
        %s170 = sadd.s32 %s168, %s169
        %s171 = smul.addr %s170, 4
        %s172 = scalar_lea.vmem %s0, %s171
      $region20: #{multichannel_linear_forward.1} parent=15 // pred_fallthru
        _
      // Predicated region
      $region21: #{multichannel_linear_forward.1} parent=15 // pred_check
        %p173 = pneg %p78
      $region22: #{multichannel_linear_forward.1} parent=15 // pred_check_branch
        %175 = sbr.rel (%p173) target = $region24
      $region23: #{multichannel_linear_forward.1} parent=15 // pred_region
        %p176 = scmp.lt.s32.totalorder %s16, 1
        %s177 = scalar_select %p176, %s16, 1
        %s178 = smul.addr %s177, 2
        %s179 = smul.addr %s178, 4
        %s180 = scalar_lea.vmem %s1, %s179
      $region24: #{multichannel_linear_forward.1} parent=15 // pred_fallthru
        _
      // Predicated region
      $region25: #{multichannel_linear_forward.1} parent=15 // pred_check
        %p181 = pneg %p104
      $region26: #{multichannel_linear_forward.1} parent=15 // pred_check_branch
        %183 = sbr.rel (%p181) target = $region28
      $region27: #{multichannel_linear_forward.1} parent=15 // pred_region
        %p184 = scmp.lt.s32.totalorder %s16, 1
        %s185 = scalar_select %p184, %s16, 1
        %s186 = scalar_lea.vmem %s2, %s185
      $region28: #{multichannel_linear_forward.1} parent=15 // pred_fallthru
        _
    $region16: #{multichannel_linear_forward.1} parent=5 // pred_fallthru
      _
    %p187 = scmp.le.s32.totalorder 1, %s9
    %p188 = scmp.lt.s32.totalorder %s9, 5
    %p189 = pnand %p187, %p188
    %p190 = pneg %p189
    // Predicated region
    $region29: #{multichannel_linear_forward.1} parent=5 // pred_check
      _
    $region30: #{multichannel_linear_forward.1} parent=5 // pred_check_branch
      %192 = sbr.rel (%p189) target = $region32
    $region31: #{multichannel_linear_forward.1} parent=5 // pred_region
      %s193 = ssub.s32 %s9, 1
      %p194 = scmp.lt.s32.totalorder %s20, 1
      %s195 = scalar_select %p194, %s20, 1
      %p196 = scmp.lt.s32.totalorder %s19, 1
      %s197 = scalar_select %p196, %s19, 1
      %p198 = scmp.lt.s32.totalorder %s21, 0
      %s199 = scalar_select %p198, %s21, 0
      %s200 = sadd.s32 %s199, %s197
      %s201 = smul.addr %s195, 2
      %s202 = sadd.s32 %s200, %s201
      %s203 = smul.addr %s202, 4
      %s204 = scalar_lea.vmem %s0, %s203
      %p205 = pneg %p58
      %p206 = pneg %p55
      %p207 = scmp.lt.s32.totalorder %s19, 1
      %s208 = scalar_select %p207, %s19, 1
      %s209 = smul.addr %s208, 2
      %s210 = smul.addr %s209, 4
      %s211 = scalar_lea.vmem %s1, %s210
      %p212 = pneg %p84
      %p213 = pneg %p81
      %p214 = scmp.lt.s32.totalorder %s19, 1
      %s215 = scalar_select %p214, %s19, 1
      %s216 = scalar_lea.vmem %s2, %s215
      %p217 = pneg %p110
      %p218 = pneg %p107
      %p219 = pneg %p140
      %p220 = pneg %p137
      %p221 = scmp.lt.s32.totalorder %s20, 1
      %s222 = scalar_select %p221, %s20, 1
      %p223 = scmp.lt.s32.totalorder %s19, 1
      %s224 = scalar_select %p223, %s19, 1
      %p225 = scmp.lt.s32.totalorder %s21, 0
      %s226 = scalar_select %p225, %s21, 0
      %s227 = sadd.s32 %s226, %s224
      %s228 = smul.addr %s222, 2
      %s229 = sadd.s32 %s227, %s228
      %s230 = smul.addr %s229, 4
      %s231 = scalar_lea.vmem %s3, %s230
      %p232 = scmp.lt.s32.totalorder %s20, 1
      %s233 = scalar_select %p232, %s20, 1
      %p234 = scmp.lt.s32.totalorder %s19, 1
      %s235 = scalar_select %p234, %s19, 1
      %p236 = scmp.lt.s32.totalorder %s21, 0
      %s237 = scalar_select %p236, %s21, 0
      %s238 = sadd.s32 %s237, %s235
      %s239 = smul.addr %s233, 2
      %s240 = sadd.s32 %s238, %s239
      %s241 = smul.addr %s240, 4
      %s242 = scalar_lea.vmem %s0, %s241
      %p243 = scmp.lt.s32.totalorder %s19, 1
      %s244 = scalar_select %p243, %s19, 1
      %s245 = smul.addr %s244, 2
      %s246 = smul.addr %s245, 4
      %s247 = scalar_lea.vmem %s1, %s246
      %p248 = scmp.lt.s32.totalorder %s19, 1
      %s249 = scalar_select %p248, %s19, 1
      %s250 = scalar_lea.vmem %s2, %s249
      %p251 = scmp.lt.s32.totalorder %s20, 1
      %s252 = scalar_select %p251, %s20, 1
      %p253 = scmp.lt.s32.totalorder %s19, 1
      %s254 = scalar_select %p253, %s19, 1
      %p255 = scmp.lt.s32.totalorder %s21, 0
      %s256 = scalar_select %p255, %s21, 0
      %s257 = sadd.s32 %s256, %s254
      %s258 = smul.addr %s252, 2
      %s259 = sadd.s32 %s257, %s258
      %s260 = smul.addr %s259, 4
      %s261 = scalar_lea.vmem %s3, %s260
      %v263 = vld [vmem:[%s247] sm:$0xf]
      %v264 = vld [vmem:[%s247 + $0x4] sm:$0xf]
      %v265 = vld [vmem:[%s250] sm:$0x1]
      %v266 = vld [vmem:[%s242] sm:$0x7]
      %v268 = vlaneseq
      %v269 = vshrl.u32 %v268, 7
      %v270 = vsub.s32 0, %v269
      %v271 = vrot.slane %v265, %v270
      %v275 = vunpack.c.l.b16 %v263
      %v276 = vunpack.c.l.b16 %v264
      %v277 = vpack.c.b16 %v276, %v275
      %vm279 = vcmask 130048
      %v281 = vsel %vm279, %v266, 0
      %283 = vmatprep.subr.bf16.mxu0 0
      %284 = vmatpush1.bf16.msra.mxu0 %v277
      %285 = vmatprep.subr.bf16.mxu0 0
      %286 = vmatpush1.bf16.msra.mxu0 0
      %287 = vmatprep.subr.bf16.mxu0 0
      %288 = vmatpush1.bf16.msra.mxu0 0
      %289 = vmatprep.subr.bf16.mxu0 0
      %290 = vmatpush1.bf16.msra.mxu0 0
      %291 = vmatprep.subr.bf16.mxu0 0
      %292 = vmatpush1.bf16.msra.mxu0 0
      %293 = vmatprep.subr.bf16.mxu0 0
      %294 = vmatpush1.bf16.msra.mxu0 0
      %295 = vmatprep.subr.bf16.mxu0 0
      %296 = vmatpush1.bf16.msra.mxu0 0
      %297 = vmatprep.subr.bf16.mxu0 0
      %298 = vmatpush1.bf16.msra.mxu0 0
      %299 = vmatprep.subr.bf16.mxu0 0
      %300 = vmatpush1.bf16.msra.mxu0 0
      %301 = vmatprep.subr.bf16.mxu0 0
      %302 = vmatpush1.bf16.msra.mxu0 0
      %303 = vmatprep.subr.bf16.mxu0 0
      %304 = vmatpush1.bf16.msra.mxu0 0
      %305 = vmatprep.subr.bf16.mxu0 0
      %306 = vmatpush1.bf16.msra.mxu0 0
      %307 = vmatprep.subr.bf16.mxu0 0
      %308 = vmatpush1.bf16.msra.mxu0 0
      %309 = vmatprep.subr.bf16.mxu0 0
      %310 = vmatpush1.bf16.msra.mxu0 0
      %311 = vmatprep.subr.bf16.mxu0 0
      %312 = vmatpush1.bf16.msra.mxu0 0
      %313 = vmatprep.subr.bf16.mxu0 0
      %314 = vmatpush1.bf16.msra.mxu0 0
      %315 = vmatprep.mubr.bf16.mxu0 0
      %316 = vmatmul.mubr.bf16.gmra.mrb[0].mxu0 %v281
      %v317 = vpop.f32.mrb[0].mxu0
      %v318 = vadd.f32 %v271, %v317
      %v319 = vpop.f32.mrb[0].mxu0
      %v320 = vpop.f32.mrb[0].mxu0
      %v321 = vpop.f32.mrb[0].mxu0
      %322 = vdwg.mxu0
      %v323 = vpack.c.bf16 %v318, %v318
      %vm324 = vcmask 256000
      %325 = vst.msk [vmem:[%s261] sm:$0x7] %vm324, %v323
      %p326 = scmp.lt.s32.totalorder %s20, 1
      %s327 = scalar_select %p326, %s20, 1
      %p328 = scmp.lt.s32.totalorder %s19, 1
      %s329 = scalar_select %p328, %s19, 1
      %p330 = scmp.lt.s32.totalorder %s21, 0
      %s331 = scalar_select %p330, %s21, 0
      %s332 = sadd.s32 %s331, %s329
      %s333 = smul.addr %s327, 2
      %s334 = sadd.s32 %s332, %s333
      %s335 = smul.addr %s334, 4
      %s336 = scalar_lea.vmem %s3, %s335
      // Predicated region
      $region33: #{multichannel_linear_forward.1} parent=31 // pred_check
        %p337 = pneg %p137
      $region34: #{multichannel_linear_forward.1} parent=31 // pred_check_branch
        %339 = sbr.rel (%p337) target = $region36
      $region35: #{multichannel_linear_forward.1} parent=31 // pred_region
        _
      $region36: #{multichannel_linear_forward.1} parent=31 // pred_fallthru
        _
    $region32: #{multichannel_linear_forward.1} parent=5 // pred_fallthru
      _
    %p340 = scmp.le.s32.totalorder 2, %s9
    // Predicated region
    $region37: #{multichannel_linear_forward.1} parent=5 // pred_check
      %p341 = pneg %p340
    $region38: #{multichannel_linear_forward.1} parent=5 // pred_check_branch
      %343 = sbr.rel (%p341) target = $region40
    $region39: #{multichannel_linear_forward.1} parent=5 // pred_region
      %s344 = ssub.s32 %s9, 2
      // Predicated region
      $region41: #{multichannel_linear_forward.1} parent=39 // pred_check
        %p345 = pneg %p143
      $region42: #{multichannel_linear_forward.1} parent=39 // pred_check_branch
        %347 = sbr.rel (%p345) target = $region44
      $region43: #{multichannel_linear_forward.1} parent=39 // pred_region
        %p348 = scmp.lt.s32.totalorder %s23, 1
        %s349 = scalar_select %p348, %s23, 1
        %p350 = scmp.lt.s32.totalorder %s22, 1
        %s351 = scalar_select %p350, %s22, 1
        %p352 = scmp.lt.s32.totalorder %s24, 0
        %s353 = scalar_select %p352, %s24, 0
        %s354 = sadd.s32 %s353, %s351
        %s355 = smul.addr %s349, 2
        %s356 = sadd.s32 %s354, %s355
        %s357 = smul.addr %s356, 4
        %s358 = scalar_lea.vmem %s3, %s357
      $region44: #{multichannel_linear_forward.1} parent=39 // pred_fallthru
        _
    $region40: #{multichannel_linear_forward.1} parent=5 // pred_fallthru
      _
  $region6: #{multichannel_linear_forward.1} parent=0 // loop_footer
    %s13 = sadd.s32 1, %s9
  $region7: #{multichannel_linear_forward.1} parent=0 // loop_footer_branch
    %8 = sbr.rel target = $region3
  $region8: #{multichannel_linear_forward.1} parent=0 // loop_exit
    _

</llo_original>
